<compile_context>
chip_gen: v7x
topology: tpu7x:2x2x1
jax: 0.10.0
libtpu: 0.0.40
codegen_flags: <defaults>
</compile_context>

<pallas_src>
import functools

import jax
import jax.numpy as jnp
from jax.experimental import pallas as pl
from jax.experimental.pallas import tpu as pltpu


def _round_up(x, m):
    return (x + m - 1) // m * m


def _pairwise_rec_kernel(h_ref, w_ref, b_ref, uembT_ref, iemb_ref,
                         lblsum_ref, cnt_ref, colmask_ref,
                         logits_ref, ce_ref, align_ref,
                         mapped_scr, m_scr, s_scr,
                         *, u_padded, inv_d):
    j = pl.program_id(1)

    @pl.when(j == 0)
    def _init():
        # mapper: mapped = h @ w_map + b_map (computed once per batch tile,
        # kept resident in VMEM scratch for every U tile)
        mapped = jnp.dot(h_ref[...], w_ref[...],
                         preferred_element_type=jnp.float32) + b_ref[...]
        mapped_scr[...] = mapped.astype(jnp.bfloat16)
        # align loss per row: (1/D) * sum_d (mapped - item_emb)^2
        diff = mapped - iemb_ref[...]
        align_ref[...] = jnp.sum(diff * diff, axis=-1, keepdims=True) * inv_d
        # online log-sum-exp accumulators
        m_scr[...] = jnp.full_like(m_scr, -jnp.inf)
        s_scr[...] = jnp.zeros_like(s_scr)

    # user_head: (tB, D) @ (D, tU) — canonical MXU matmul, lane-dense on U.
    logits = jnp.dot(mapped_scr[...], uembT_ref[...],
                     preferred_element_type=jnp.float32)            # (tB, tU) f32

    if u_padded:
        # additive mask row: 0 on valid user columns, -1e30 on padded ones.
        logits = logits + colmask_ref[...]

    # bf16 writeback halves the dominant HBM store; math below stays f32.
    logits_ref[...] = logits.astype(logits_ref.dtype)

    # online log-sum-exp over the streamed (arbitrary) U axis
    m_new = jnp.maximum(m_scr[...], jnp.max(logits, axis=-1, keepdims=True))
    s_scr[...] = (s_scr[...] * jnp.exp(m_scr[...] - m_new)
                  + jnp.sum(jnp.exp(logits - m_new), axis=-1, keepdims=True))
    m_scr[...] = m_new

    @pl.when(j == pl.num_programs(1) - 1)
    def _finalize():
        # ce = -sum_u(lbl*logits) + lse*sum_u(lbl).  The label-side terms were
        # reduced to per-row constants in the wrapper (sum of labelled user
        # embeddings / label count), so no dense (B,U) label tensor exists.
        lse = m_scr[...] + jnp.log(s_scr[...])
        dot = jnp.sum(mapped_scr[...].astype(jnp.float32) * lblsum_ref[...],
                      axis=-1, keepdims=True)
        ce_ref[...] = -dot + lse * cnt_ref[...]


def pairwise_rec_forward(h, w_map, b_map, user_emb, item_emb, labels,
                         *, block_b=256, block_u=1024,
                         logits_dtype=jnp.bfloat16):
    B, H = h.shape
    D = w_map.shape[1]
    U = user_emb.shape[0]
    K = labels.shape[1]
    f32, bf16 = jnp.float32, jnp.bfloat16

    # ---- tiling -------------------------------------------------------------
    tB = min(block_b, _round_up(B, 8))
    if B > 8 and _round_up(B, tB) // tB < 2:
        # v7x megacore: keep >= 2 tiles on the "parallel" batch axis.
        tB = _round_up((B + 1) // 2, 8)
    Bp = _round_up(B, tB)
    tU = min(block_u, _round_up(U, 128))
    Up = _round_up(U, tU)
    u_padded = Up != U

    # ---- operand prep (bf16 MXU operands; pad only when needed) -------------
    def _pad_rows(x, rows, dtype):
        x = x.astype(dtype)
        if x.shape[0] == rows:
            return x
        return jnp.zeros((rows,) + x.shape[1:], dtype).at[:x.shape[0]].set(x)

    h_bf = _pad_rows(h, Bp, bf16)
    w_bf = w_map.astype(bf16)
    b_f = b_map.reshape(1, D).astype(f32)
    # TODO(synk): in production the user-embedding table should be stored
    # persistently as a bf16 (D, U) slab; the transpose + cast below is a
    # one-off wrapper copy, not part of the kernel.
    uembT = user_emb.astype(bf16).T                          # (D, U) bf16
    if u_padded:
        uembT = jnp.zeros((D, Up), bf16).at[:, :U].set(uembT)
    iemb = _pad_rows(item_emb, Bp, f32)

    # labels (B, K) int32 -> per-row soft-target summaries.  Reproduces
    # get_multi_hot_label semantics: labels < 0 are dropped (column 0 of the
    # scatter) and duplicates within a row collapse to a single hit.
    lbl = labels.astype(jnp.int32)
    valid = (lbl >= 0) & (lbl < U)
    dup = ((lbl[:, :, None] == lbl[:, None, :])
           & (jnp.arange(K)[None, :] < jnp.arange(K)[:, None])[None]).any(-1)
    valid = (valid & ~dup).astype(f32)
    safe = jnp.where(valid > 0, lbl, 0)
    lbl_emb = user_emb[safe].astype(bf16).astype(f32) * valid[..., None]
    lblsum = _pad_rows(lbl_emb.sum(axis=1), Bp, f32)               # (Bp, D)
    cnt = _pad_rows(valid.sum(axis=1, keepdims=True), Bp, f32)     # (Bp, 1)

    col_mask = jnp.zeros((1, Up), f32)
    if u_padded:
        col_mask = col_mask.at[:, U:].set(-1e30)

    kernel = functools.partial(_pairwise_rec_kernel,
                               u_padded=u_padded, inv_d=1.0 / D)
    grid = (Bp // tB, Up // tU)
    n_btiles = grid[0]

    cost = pl.CostEstimate(
        flops=2 * Bp * H * D + 2 * Bp * D * Up,
        transcendentals=Bp * Up,
        bytes_accessed=(h_bf.size * 2 + w_bf.size * 2 * n_btiles
                        + uembT.size * 2 * n_btiles + iemb.size * 4
                        + lblsum.size * 4 + cnt.size * 4
                        + col_mask.size * 4 * n_btiles
                        + Bp * Up * jnp.dtype(logits_dtype).itemsize
                        + Bp * 8))

    logits_p, ce_rows, align_rows = pl.pallas_call(
        kernel,
        out_shape=(
            jax.ShapeDtypeStruct((Bp, Up), logits_dtype),  # logits (lane-dense)
            jax.ShapeDtypeStruct((Bp, 1), f32),            # per-row cross-entropy
            jax.ShapeDtypeStruct((Bp, 1), f32),            # per-row align (MSE over D)
        ),
        grid_spec=pltpu.PrefetchScalarGridSpec(
            num_scalar_prefetch=0,
            grid=grid,
            in_specs=[
                pl.BlockSpec((tB, H), lambda i, j: (i, 0)),   # h
                pl.BlockSpec((H, D), lambda i, j: (0, 0)),    # w_map
                pl.BlockSpec((1, D), lambda i, j: (0, 0)),    # b_map
                pl.BlockSpec((D, tU), lambda i, j: (0, j)),   # user_emb^T (D, U)
                pl.BlockSpec((tB, D), lambda i, j: (i, 0)),   # item_emb
                pl.BlockSpec((tB, D), lambda i, j: (i, 0)),   # sum of label embeddings
                pl.BlockSpec((tB, 1), lambda i, j: (i, 0)),   # label count
                pl.BlockSpec((1, tU), lambda i, j: (0, j)),   # pad-column mask
            ],
            out_specs=(
                pl.BlockSpec((tB, tU), lambda i, j: (i, j)),  # logits
                pl.BlockSpec((tB, 1), lambda i, j: (i, 0)),   # ce per row
                pl.BlockSpec((tB, 1), lambda i, j: (i, 0)),   # align per row
            ),
            scratch_shapes=[
                pltpu.VMEM((tB, D), bf16),   # mapped hidden (reused per U tile)
                pltpu.VMEM((tB, 1), f32),    # running max
                pltpu.VMEM((tB, 1), f32),    # running sum-exp
            ],
        ),
        compiler_params=pltpu.CompilerParams(
            dimension_semantics=("parallel", "arbitrary"),
            vmem_limit_bytes=32 * 1024 * 1024),
        cost_estimate=cost,
    )(h_bf, w_bf, b_f, uembT, iemb, lblsum, cnt, col_mask)

    logits = logits_p if (Bp == B and Up == U) else logits_p[:B, :U]
    inter_loss = jnp.mean(ce_rows[:B, 0])
    align_loss = jnp.mean(align_rows[:B, 0])
    loss = align_loss + inter_loss          # 1 * align_loss + interaction_loss
    return logits, loss, inter_loss


if __name__ == "__main__":
    # Small, deterministic shapes consistent with the module's forward.
    B, S, H, D = 4, 8, 64, 32          # batch, seq, llm hidden, embedding dim
    NUM_USERS, NUM_ITEMS, K = 128, 64, 3

    key = jax.random.PRNGKey(0)
    k1, k2, k3, k4, k5, k6 = jax.random.split(key, 6)

    # TODO(synk): the LLaMA encoder forward (outputs_main.hidden_states[-1]) is not
    # translated; its last-layer hidden states are synthesized deterministically here.
    hidden_states = jax.random.normal(k1, (B, S, H), jnp.float32)
    h = hidden_states[:, -1, :]                                   # last-token hidden

    w_map = 0.05 * jax.random.normal(k2, (H, D), jnp.float32)     # encoder.mapper
    b_map = jnp.zeros((1, D), jnp.float32)
    user_emb = 0.05 * jax.random.normal(k3, (NUM_USERS, D), jnp.float32)
    item_emb_table = 0.05 * jax.random.normal(k4, (NUM_ITEMS, D), jnp.float32)

    item_id = jax.random.randint(k5, (B,), 0, NUM_ITEMS)
    labels = jax.random.randint(k6, (B, K), 0, NUM_USERS)

    # Glue: item-embedding gather (encoder.item_embeddings(item_id)).
    item_emb = item_emb_table[item_id]                            # (B, D)

    fwd = jax.jit(pairwise_rec_forward)
    logits, loss, inter = fwd(h, w_map, b_map, user_emb, item_emb, labels)
    jax.block_until_ready((logits, loss, inter))

    # Pure-JAX reference, mirroring the wrapper's bf16 MXU-operand casts.
    bf = lambda x: x.astype(jnp.bfloat16).astype(jnp.float32)
    mapped_ref = bf(h) @ bf(w_map) + b_map
    logits_ref = bf(mapped_ref) @ bf(user_emb).T
    align_ref = jnp.mean((mapped_ref - item_emb) ** 2)
    multi_lbl = (labels[:, :, None] == jnp.arange(NUM_USERS)[None, None, :]) \
        .any(axis=1).astype(jnp.float32)                          # (B, U) reference only
    logp_ref = jax.nn.log_softmax(logits_ref, axis=-1)
    inter_ref = jnp.mean(-jnp.sum(multi_lbl * logp_ref, axis=-1))
    loss_ref = align_ref + inter_ref

    assert jnp.allclose(logits.astype(jnp.float32), logits_ref,
                        atol=5e-3, rtol=1e-2), "logits mismatch"
    assert jnp.allclose(inter, inter_ref, atol=2e-3, rtol=1e-3), "inter mismatch"
    assert jnp.allclose(loss, loss_ref, atol=2e-3, rtol=1e-3), "loss mismatch"

    print("KERNEL_OK")
</pallas_src>

<mosaic_0001>
module attributes {stable_mosaic.version = 11 : i64} {
  func.func @_pairwise_rec_kernel(%arg0: i32, %arg1: i32, %arg2: memref<8x64xbf16, #tpu.memory_space<vmem>>, %arg3: memref<64x32xbf16, #tpu.memory_space<vmem>>, %arg4: memref<1x32xf32, #tpu.memory_space<vmem>>, %arg5: memref<32x128xbf16, #tpu.memory_space<vmem>>, %arg6: memref<8x32xf32, #tpu.memory_space<vmem>>, %arg7: memref<8x32xf32, #tpu.memory_space<vmem>>, %arg8: memref<8x1xf32, #tpu.memory_space<vmem>>, %arg9: memref<1x128xf32, #tpu.memory_space<vmem>>, %arg10: memref<8x128xbf16, #tpu.memory_space<vmem>>, %arg11: memref<8x1xf32, #tpu.memory_space<vmem>>, %arg12: memref<8x1xf32, #tpu.memory_space<vmem>>, %arg13: memref<8x32xbf16, #tpu.memory_space<vmem>>, %arg14: memref<8x1xf32, #tpu.memory_space<vmem>>, %arg15: memref<8x1xf32, #tpu.memory_space<vmem>>) attributes {dimension_semantics = [#tpu.dimension_semantics<parallel>, #tpu.dimension_semantics<arbitrary>], iteration_bounds = array<i64: 1, 1>, scalar_prefetch = 0 : i64, scratch_operands = 3 : i64, tpu.core_type = #tpu.core_type<tc>, window_params = [{transform_indices = @transform_0, window_bounds = array<i64: 8, 64>}, {pipeline_mode = #tpu.pipeline_mode<synchronous>, transform_indices = @transform_1, window_bounds = array<i64: 64, 32>}, {pipeline_mode = #tpu.pipeline_mode<synchronous>, transform_indices = @transform_2, window_bounds = array<i64: 1, 32>}, {transform_indices = @transform_3, window_bounds = array<i64: 32, 128>}, {transform_indices = @transform_4, window_bounds = array<i64: 8, 32>}, {transform_indices = @transform_5, window_bounds = array<i64: 8, 32>}, {transform_indices = @transform_6, window_bounds = array<i64: 8, 1>}, {transform_indices = @transform_7, window_bounds = array<i64: 1, 128>}, {transform_indices = @transform_8, window_bounds = array<i64: 8, 128>}, {transform_indices = @transform_9, window_bounds = array<i64: 8, 1>}, {transform_indices = @transform_10, window_bounds = array<i64: 8, 1>}]} {
    %c0_i32 = arith.constant 0 : i32
    %0 = arith.cmpi eq, %arg1, %c0_i32 : i32
    %1 = arith.extui %0 : i1 to i32
    %c0_i32_0 = arith.constant 0 : i32
    %2 = arith.cmpi ne, %1, %c0_i32_0 : i32
    scf.if %2 {
      %c0_20 = arith.constant 0 : index
      %c0_21 = arith.constant 0 : index
      %28 = vector.load %arg2[%c0_20, %c0_21] : memref<8x64xbf16, #tpu.memory_space<vmem>>, vector<8x64xbf16>
      %c0_22 = arith.constant 0 : index
      %c0_23 = arith.constant 0 : index
      %29 = vector.load %arg3[%c0_22, %c0_23] : memref<64x32xbf16, #tpu.memory_space<vmem>>, vector<64x32xbf16>
      %cst_24 = arith.constant dense<0.000000e+00> : vector<8x32xf32>
      %30 = tpu.matmul %28, %29, %cst_24 {dimension_numbers = #tpu.dot_dimension_numbers<[1], [0], [0], [1], [0, 0, 1, 1], [], []>} : vector<8x64xbf16>, vector<64x32xbf16>, vector<8x32xf32> -> vector<8x32xf32>
      %c0_25 = arith.constant 0 : index
      %c0_26 = arith.constant 0 : index
      %31 = vector.load %arg4[%c0_25, %c0_26] : memref<1x32xf32, #tpu.memory_space<vmem>>, vector<1x32xf32>
      %32 = vector.broadcast %31 : vector<1x32xf32> to vector<8x32xf32>
      %33 = arith.addf %30, %32 : vector<8x32xf32>
      %34 = arith.truncf %33 : vector<8x32xf32> to vector<8x32xbf16>
      %c0_27 = arith.constant 0 : index
      %c0_28 = arith.constant 0 : index
      %35 = vector.load %arg13[%c0_27, %c0_28] : memref<8x32xbf16, #tpu.memory_space<vmem>>, vector<8x32xbf16>
      tpu.vector_store %arg13[%c0_27, %c0_28], %34 {strides = array<i32>} : memref<8x32xbf16, #tpu.memory_space<vmem>>, vector<8x32xbf16>,
      %c0_29 = arith.constant 0 : index
      %c0_30 = arith.constant 0 : index
      %36 = vector.load %arg6[%c0_29, %c0_30] : memref<8x32xf32, #tpu.memory_space<vmem>>, vector<8x32xf32>
      %37 = arith.subf %33, %36 : vector<8x32xf32>
      %38 = arith.mulf %37, %37 : vector<8x32xf32>
      %cst_31 = arith.constant dense<0.000000e+00> : vector<8xf32>
      %39 = vector.multi_reduction <add>, %38, %cst_31 [1] : vector<8x32xf32> to vector<8xf32>
      %40 = vector.shape_cast %39 : vector<8xf32> to vector<8x1xf32>
      %cst_32 = arith.constant 3.125000e-02 : f32
      %41 = vector.broadcast %cst_32 : f32 to vector<8x1xf32>
      %42 = arith.mulf %40, %41 : vector<8x1xf32>
      %c0_33 = arith.constant 0 : index
      %c0_34 = arith.constant 0 : index
      %43 = vector.load %arg12[%c0_33, %c0_34] : memref<8x1xf32, #tpu.memory_space<vmem>>, vector<8x1xf32>
      tpu.vector_store %arg12[%c0_33, %c0_34], %42 {strides = array<i32>} : memref<8x1xf32, #tpu.memory_space<vmem>>, vector<8x1xf32>,
      %cst_35 = arith.constant 0xFF800000 : f32
      %44 = vector.broadcast %cst_35 : f32 to vector<8x1xf32>
      %c0_36 = arith.constant 0 : index
      %c0_37 = arith.constant 0 : index
      %45 = vector.load %arg14[%c0_36, %c0_37] : memref<8x1xf32, #tpu.memory_space<vmem>>, vector<8x1xf32>
      tpu.vector_store %arg14[%c0_36, %c0_37], %44 {strides = array<i32>} : memref<8x1xf32, #tpu.memory_space<vmem>>, vector<8x1xf32>,
      %cst_38 = arith.constant 0.000000e+00 : f32
      %46 = vector.broadcast %cst_38 : f32 to vector<8x1xf32>
      %c0_39 = arith.constant 0 : index
      %c0_40 = arith.constant 0 : index
      %47 = vector.load %arg15[%c0_39, %c0_40] : memref<8x1xf32, #tpu.memory_space<vmem>>, vector<8x1xf32>
      tpu.vector_store %arg15[%c0_39, %c0_40], %46 {strides = array<i32>} : memref<8x1xf32, #tpu.memory_space<vmem>>, vector<8x1xf32>,
    } else {
    }
    %c0 = arith.constant 0 : index
    %c0_1 = arith.constant 0 : index
    %3 = vector.load %arg13[%c0, %c0_1] : memref<8x32xbf16, #tpu.memory_space<vmem>>, vector<8x32xbf16>
    %c0_2 = arith.constant 0 : index
    %c0_3 = arith.constant 0 : index
    %4 = vector.load %arg5[%c0_2, %c0_3] : memref<32x128xbf16, #tpu.memory_space<vmem>>, vector<32x128xbf16>
    %cst = arith.constant dense<0.000000e+00> : vector<8x128xf32>
    %5 = tpu.matmul %3, %4, %cst {dimension_numbers = #tpu.dot_dimension_numbers<[1], [0], [0], [1], [0, 0, 1, 1], [], []>} : vector<8x32xbf16>, vector<32x128xbf16>, vector<8x128xf32> -> vector<8x128xf32>
    %6 = arith.truncf %5 : vector<8x128xf32> to vector<8x128xbf16>
    %c0_4 = arith.constant 0 : index
    %c0_5 = arith.constant 0 : index
    %7 = vector.load %arg10[%c0_4, %c0_5] : memref<8x128xbf16, #tpu.memory_space<vmem>>, vector<8x128xbf16>
    tpu.vector_store %arg10[%c0_4, %c0_5], %6 {strides = array<i32>} : memref<8x128xbf16, #tpu.memory_space<vmem>>, vector<8x128xbf16>,
    %c0_6 = arith.constant 0 : index
    %c0_7 = arith.constant 0 : index
    %8 = vector.load %arg14[%c0_6, %c0_7] : memref<8x1xf32, #tpu.memory_space<vmem>>, vector<8x1xf32>
    %cst_8 = arith.constant dense<0xFF800000> : vector<8xf32>
    %9 = vector.multi_reduction <maximumf>, %5, %cst_8 [1] : vector<8x128xf32> to vector<8xf32>
    %10 = vector.shape_cast %9 : vector<8xf32> to vector<8x1xf32>
    %11 = arith.maximumf %8, %10 : vector<8x1xf32>
    %c0_9 = arith.constant 0 : index
    %c0_10 = arith.constant 0 : index
    %12 = vector.load %arg15[%c0_9, %c0_10] : memref<8x1xf32, #tpu.memory_space<vmem>>, vector<8x1xf32>
    %c0_11 = arith.constant 0 : index
    %c0_12 = arith.constant 0 : index
    %13 = vector.load %arg14[%c0_11, %c0_12] : memref<8x1xf32, #tpu.memory_space<vmem>>, vector<8x1xf32>
    %14 = arith.subf %13, %11 : vector<8x1xf32>
    %15 = math.exp %14 : vector<8x1xf32>
    %16 = arith.mulf %12, %15 : vector<8x1xf32>
    %17 = vector.broadcast %11 : vector<8x1xf32> to vector<8x128xf32>
    %18 = arith.subf %5, %17 : vector<8x128xf32>
    %19 = math.exp %18 : vector<8x128xf32>
    %cst_13 = arith.constant dense<0.000000e+00> : vector<8xf32>
    %20 = vector.multi_reduction <add>, %19, %cst_13 [1] : vector<8x128xf32> to vector<8xf32>
    %21 = vector.shape_cast %20 : vector<8xf32> to vector<8x1xf32>
    %22 = arith.addf %16, %21 : vector<8x1xf32>
    %c0_14 = arith.constant 0 : index
    %c0_15 = arith.constant 0 : index
    %23 = vector.load %arg15[%c0_14, %c0_15] : memref<8x1xf32, #tpu.memory_space<vmem>>, vector<8x1xf32>
    tpu.vector_store %arg15[%c0_14, %c0_15], %22 {strides = array<i32>} : memref<8x1xf32, #tpu.memory_space<vmem>>, vector<8x1xf32>,
    %c0_16 = arith.constant 0 : index
    %c0_17 = arith.constant 0 : index
    %24 = vector.load %arg14[%c0_16, %c0_17] : memref<8x1xf32, #tpu.memory_space<vmem>>, vector<8x1xf32>
    tpu.vector_store %arg14[%c0_16, %c0_17], %11 {strides = array<i32>} : memref<8x1xf32, #tpu.memory_space<vmem>>, vector<8x1xf32>,
    %c0_i32_18 = arith.constant 0 : i32
    %25 = arith.cmpi eq, %arg1, %c0_i32_18 : i32
    %26 = arith.extui %25 : i1 to i32
    %c0_i32_19 = arith.constant 0 : i32
    %27 = arith.cmpi ne, %26, %c0_i32_19 : i32
    scf.if %27 {
      %c0_20 = arith.constant 0 : index
      %c0_21 = arith.constant 0 : index
      %28 = vector.load %arg14[%c0_20, %c0_21] : memref<8x1xf32, #tpu.memory_space<vmem>>, vector<8x1xf32>
      %c0_22 = arith.constant 0 : index
      %c0_23 = arith.constant 0 : index
      %29 = vector.load %arg15[%c0_22, %c0_23] : memref<8x1xf32, #tpu.memory_space<vmem>>, vector<8x1xf32>
      %30 = math.log %29 : vector<8x1xf32>
      %31 = arith.addf %28, %30 : vector<8x1xf32>
      %c0_24 = arith.constant 0 : index
      %c0_25 = arith.constant 0 : index
      %32 = vector.load %arg13[%c0_24, %c0_25] : memref<8x32xbf16, #tpu.memory_space<vmem>>, vector<8x32xbf16>
      %33 = arith.extf %32 : vector<8x32xbf16> to vector<8x32xf32>
      %c0_26 = arith.constant 0 : index
      %c0_27 = arith.constant 0 : index
      %34 = vector.load %arg7[%c0_26, %c0_27] : memref<8x32xf32, #tpu.memory_space<vmem>>, vector<8x32xf32>
      %35 = arith.mulf %33, %34 : vector<8x32xf32>
      %cst_28 = arith.constant dense<0.000000e+00> : vector<8xf32>
      %36 = vector.multi_reduction <add>, %35, %cst_28 [1] : vector<8x32xf32> to vector<8xf32>
      %37 = vector.shape_cast %36 : vector<8xf32> to vector<8x1xf32>
      %cst_29 = arith.constant 0.000000e+00 : f32
      %38 = vector.broadcast %cst_29 : f32 to vector<8x1xf32>
      %39 = arith.subf %38, %37 : vector<8x1xf32>
      %c0_30 = arith.constant 0 : index
      %c0_31 = arith.constant 0 : index
      %40 = vector.load %arg8[%c0_30, %c0_31] : memref<8x1xf32, #tpu.memory_space<vmem>>, vector<8x1xf32>
      %41 = arith.mulf %31, %40 : vector<8x1xf32>
      %42 = arith.addf %39, %41 : vector<8x1xf32>
      %c0_32 = arith.constant 0 : index
      %c0_33 = arith.constant 0 : index
      %43 = vector.load %arg11[%c0_32, %c0_33] : memref<8x1xf32, #tpu.memory_space<vmem>>, vector<8x1xf32>
      tpu.vector_store %arg11[%c0_32, %c0_33], %42 {strides = array<i32>} : memref<8x1xf32, #tpu.memory_space<vmem>>, vector<8x1xf32>,
    } else {
    }
    return
  }
  func.func @transform_0(%arg0: i32, %arg1: i32) -> (i32, i32) {
    %c0_i32 = arith.constant 0 : i32
    %c0_i32_0 = arith.constant 0 : i32
    return %arg0, %c0_i32 : i32, i32
  }
  func.func @transform_1(%arg0: i32, %arg1: i32) -> (i32, i32) {
    %c0_i32 = arith.constant 0 : i32
    %c0_i32_0 = arith.constant 0 : i32
    %c0_i32_1 = arith.constant 0 : i32
    return %c0_i32, %c0_i32_0 : i32, i32
  }
  func.func @transform_2(%arg0: i32, %arg1: i32) -> (i32, i32) {
    %c0_i32 = arith.constant 0 : i32
    %c0_i32_0 = arith.constant 0 : i32
    %c0_i32_1 = arith.constant 0 : i32
    return %c0_i32, %c0_i32_0 : i32, i32
  }
  func.func @transform_3(%arg0: i32, %arg1: i32) -> (i32, i32) {
    %c0_i32 = arith.constant 0 : i32
    %c0_i32_0 = arith.constant 0 : i32
    return %c0_i32, %arg1 : i32, i32
  }
  func.func @transform_4(%arg0: i32, %arg1: i32) -> (i32, i32) {
    %c0_i32 = arith.constant 0 : i32
    %c0_i32_0 = arith.constant 0 : i32
    return %arg0, %c0_i32 : i32, i32
  }
  func.func @transform_5(%arg0: i32, %arg1: i32) -> (i32, i32) {
    %c0_i32 = arith.constant 0 : i32
    %c0_i32_0 = arith.constant 0 : i32
    return %arg0, %c0_i32 : i32, i32
  }
  func.func @transform_6(%arg0: i32, %arg1: i32) -> (i32, i32) {
    %c0_i32 = arith.constant 0 : i32
    %c0_i32_0 = arith.constant 0 : i32
    return %arg0, %c0_i32 : i32, i32
  }
  func.func @transform_7(%arg0: i32, %arg1: i32) -> (i32, i32) {
    %c0_i32 = arith.constant 0 : i32
    %c0_i32_0 = arith.constant 0 : i32
    return %c0_i32, %arg1 : i32, i32
  }
  func.func @transform_8(%arg0: i32, %arg1: i32) -> (i32, i32) {
    %c0_i32 = arith.constant 0 : i32
    return %arg0, %arg1 : i32, i32
  }
  func.func @transform_9(%arg0: i32, %arg1: i32) -> (i32, i32) {
    %c0_i32 = arith.constant 0 : i32
    %c0_i32_0 = arith.constant 0 : i32
    return %arg0, %c0_i32 : i32, i32
  }
  func.func @transform_10(%arg0: i32, %arg1: i32) -> (i32, i32) {
    %c0_i32 = arith.constant 0 : i32
    %c0_i32_0 = arith.constant 0 : i32
    return %arg0, %c0_i32 : i32, i32
  }
}

</mosaic_0001>

<llo_original>
// kernel: pairwise_rec_forward.1
$region0: #{pairwise_rec_forward.1}
  #allocation0 [shape = 'u32[]', space=smem, size = 0x4, offset = 0x4, fixed_abs, tag = 'smem constant byte address 0x4 - core index']
  #allocation1 [shape = 'u32[144,128]{1,0:T(1,128)}', space=vmem, size = 0x12000, scoped, tag = 'internal scratch']
  #allocation2 [shape = 'bf16[8,32]{1,0:T(8,128)(2,1)}', space=vmem, size = 0x800, scoped, tag = 'scratch operand']
  #allocation3 [shape = 'f32[8,1]{1,0:T(8,128)}', space=vmem, size = 0x1000, scoped, tag = 'scratch operand']
  #allocation4 [shape = 'f32[8,1]{1,0:T(8,128)}', space=vmem, size = 0x1000, scoped, tag = 'scratch operand']
  %s0 = inlined_call_operand.vmem [shape: bf16[8,64], index: 0, kind: input, shape index: {}]
  %s1 = inlined_call_operand.vmem [shape: bf16[64,32], index: 1, kind: input, shape index: {}]
  %s2 = inlined_call_operand.vmem [shape: f32[1,32], index: 2, kind: input, shape index: {}]
  %s3 = inlined_call_operand.vmem [shape: bf16[32,128], index: 3, kind: input, shape index: {}]
  %s4 = inlined_call_operand.vmem [shape: f32[8,32], index: 4, kind: input, shape index: {}]
  %s5 = inlined_call_operand.vmem [shape: f32[8,32], index: 5, kind: input, shape index: {}]
  %s6 = inlined_call_operand.vmem [shape: f32[8,1], index: 6, kind: input, shape index: {}]
  %s7 = inlined_call_operand.vmem [shape: f32[1,128], index: 7, kind: input, shape index: {}]
  %s8 = inlined_call_operand.vmem [shape: bf16[8,128], index: 8, kind: output, shape index: {0}]
  %s9 = inlined_call_operand.vmem [shape: f32[8,1], index: 9, kind: output, shape index: {1}]
  %s10 = inlined_call_operand.vmem [shape: f32[8,1], index: 10, kind: output, shape index: {2}]
  %11 = xla_tuple %s8, %s9, %s10
  %s12 = sld [smem:[#allocation0]]
  $region66: #{pairwise_rec_forward.1} parent=0
    _
  %s14 = ssub.s32 1, %s12
  %s15 = scalar_select 0, %s14, %s12
  // Predicated region
  $region2: #{pairwise_rec_forward.1} parent=0 // pred_check
    _
  $region3: #{pairwise_rec_forward.1} parent=0 // pred_check_branch
    %17 = sbr.rel (0) target = $region5
  $region4: #{pairwise_rec_forward.1} parent=0 // pred_region
    _
  $region5: #{pairwise_rec_forward.1} parent=0 // pred_fallthru
    _
  // Predicated region
  $region6: #{pairwise_rec_forward.1} parent=0 // pred_check
    _
  $region7: #{pairwise_rec_forward.1} parent=0 // pred_check_branch
    %19 = sbr.rel (0) target = $region9
  $region8: #{pairwise_rec_forward.1} parent=0 // pred_region
    _
  $region9: #{pairwise_rec_forward.1} parent=0 // pred_fallthru
    _
  // Predicated region
  $region10: #{pairwise_rec_forward.1} parent=0 // pred_check
    _
  $region11: #{pairwise_rec_forward.1} parent=0 // pred_check_branch
    %21 = sbr.rel (0) target = $region13
  $region12: #{pairwise_rec_forward.1} parent=0 // pred_region
    _
  $region13: #{pairwise_rec_forward.1} parent=0 // pred_fallthru
    _
  // Predicated region
  $region14: #{pairwise_rec_forward.1} parent=0 // pred_check
    _
  $region15: #{pairwise_rec_forward.1} parent=0 // pred_check_branch
    %23 = sbr.rel (0) target = $region17
  $region16: #{pairwise_rec_forward.1} parent=0 // pred_region
    _
  $region17: #{pairwise_rec_forward.1} parent=0 // pred_fallthru
    _
  // Predicated region
  $region18: #{pairwise_rec_forward.1} parent=0 // pred_check
    _
  $region19: #{pairwise_rec_forward.1} parent=0 // pred_check_branch
    %25 = sbr.rel (0) target = $region21
  $region20: #{pairwise_rec_forward.1} parent=0 // pred_region
    _
  $region21: #{pairwise_rec_forward.1} parent=0 // pred_fallthru
    _
  // Predicated region
  $region22: #{pairwise_rec_forward.1} parent=0 // pred_check
    _
  $region23: #{pairwise_rec_forward.1} parent=0 // pred_check_branch
    %27 = sbr.rel (0) target = $region25
  $region24: #{pairwise_rec_forward.1} parent=0 // pred_region
    _
  $region25: #{pairwise_rec_forward.1} parent=0 // pred_fallthru
    _
  // Predicated region
  $region26: #{pairwise_rec_forward.1} parent=0 // pred_check
    _
  $region27: #{pairwise_rec_forward.1} parent=0 // pred_check_branch
    %29 = sbr.rel (0) target = $region29
  $region28: #{pairwise_rec_forward.1} parent=0 // pred_region
    _
  $region29: #{pairwise_rec_forward.1} parent=0 // pred_fallthru
    _
  // Predicated region
  $region30: #{pairwise_rec_forward.1} parent=0 // pred_check
    _
  $region31: #{pairwise_rec_forward.1} parent=0 // pred_check_branch
    %31 = sbr.rel (0) target = $region33
  $region32: #{pairwise_rec_forward.1} parent=0 // pred_region
    _
  $region33: #{pairwise_rec_forward.1} parent=0 // pred_fallthru
    _
  %p33 = scmp.eq.s32.totalorder 0, 0
  // Predicated region
  $region34: #{pairwise_rec_forward.1} parent=0 // pred_check
    %p34 = pneg %p33
  $region35: #{pairwise_rec_forward.1} parent=0 // pred_check_branch
    %36 = sbr.rel (%p34) target = $region37
  $region36: #{pairwise_rec_forward.1} parent=0 // pred_region
    %v37 = vld [vmem:[%s0] sm:$0xf]
    %v38 = vld [vmem:[%s1] sm:$0xf]
    %v39 = vld [vmem:[%s1 + $0x4] sm:$0xf]
    %v40 = vld [vmem:[%s1 + $0x8] sm:$0xf]
    %v41 = vld [vmem:[%s1 + $0xc] sm:$0xf]
    %v42 = vld [vmem:[%s1 + $0x10] sm:$0xf]
    %v43 = vld [vmem:[%s1 + $0x14] sm:$0xf]
    %v44 = vld [vmem:[%s1 + $0x18] sm:$0xf]
    %v45 = vld [vmem:[%s1 + $0x1c] sm:$0xf]
    %v46 = vld [vmem:[%s2] sm:$0x1]
    %v48 = vlaneseq
    %v49 = vshrl.u32 %v48, 7
    %v50 = vsub.s32 0, %v49
    %v51 = vrot.slane %v46, %v50
    %v61 = vunpack.c.l.b16 %v38
    %v62 = vunpack.c.l.b16 %v39
    %v63 = vunpack.c.l.b16 %v40
    %v64 = vunpack.c.l.b16 %v41
    %v65 = vunpack.c.l.b16 %v42
    %v66 = vunpack.c.l.b16 %v43
    %v67 = vunpack.c.l.b16 %v44
    %v68 = vunpack.c.l.b16 %v45
    %v69 = vpack.c.b16 %v62, %v61
    %v70 = vpack.c.b16 %v64, %v63
    %v71 = vpack.c.b16 %v66, %v65
    %v72 = vpack.c.b16 %v68, %v67
    %vm77 = vcmask 523264
    %v79 = vsel %vm77, %v37, 0
    %81 = vmatprep.subr.bf16.mxu0 0
    %82 = vmatpush1.bf16.msra.mxu0 %v69
    %83 = vmatprep.subr.bf16.mxu0 0
    %84 = vmatpush1.bf16.msra.mxu0 %v70
    %85 = vmatprep.subr.bf16.mxu0 0
    %86 = vmatpush1.bf16.msra.mxu0 %v71
    %87 = vmatprep.subr.bf16.mxu0 0
    %88 = vmatpush1.bf16.msra.mxu0 %v72
    %89 = vmatprep.subr.bf16.mxu0 0
    %90 = vmatpush1.bf16.msra.mxu0 0
    %91 = vmatprep.subr.bf16.mxu0 0
    %92 = vmatpush1.bf16.msra.mxu0 0
    %93 = vmatprep.subr.bf16.mxu0 0
    %94 = vmatpush1.bf16.msra.mxu0 0
    %95 = vmatprep.subr.bf16.mxu0 0
    %96 = vmatpush1.bf16.msra.mxu0 0
    %97 = vmatprep.subr.bf16.mxu0 0
    %98 = vmatpush1.bf16.msra.mxu0 0
    %99 = vmatprep.subr.bf16.mxu0 0
    %100 = vmatpush1.bf16.msra.mxu0 0
    %101 = vmatprep.subr.bf16.mxu0 0
    %102 = vmatpush1.bf16.msra.mxu0 0
    %103 = vmatprep.subr.bf16.mxu0 0
    %104 = vmatpush1.bf16.msra.mxu0 0
    %105 = vmatprep.subr.bf16.mxu0 0
    %106 = vmatpush1.bf16.msra.mxu0 0
    %107 = vmatprep.subr.bf16.mxu0 0
    %108 = vmatpush1.bf16.msra.mxu0 0
    %109 = vmatprep.subr.bf16.mxu0 0
    %110 = vmatpush1.bf16.msra.mxu0 0
    %111 = vmatprep.subr.bf16.mxu0 0
    %112 = vmatpush1.bf16.msra.mxu0 0
    %113 = vmatprep.mubr.bf16.mxu0 0
    %114 = vmatmul.mubr.bf16.gmra.mrb[0].mxu0 %v79
    %v115 = vpop.f32.mrb[0].mxu0
    %v116 = vadd.f32 %v51, %v115
    %v117 = vpop.f32.mrb[0].mxu0
    %v118 = vpop.f32.mrb[0].mxu0
    %v119 = vpop.f32.mrb[0].mxu0
    %120 = vdwg.mxu0
    %v121 = vpack.c.bf16 %v116, %v116
    %vm122 = vcmask 257024
    %123 = vst.msk [vmem:[#allocation2] sm:$0xf] %vm122, %v121
    %v124 = vld [vmem:[%s4] sm:$0xff]
    %v125 = vsub.f32 %v116, %v124
    %v126 = vmul.f32 %v125, %v125
    %vm127 = vcmask 261120
    %v128 = vsel %vm127, %v126, 0.0
    %129 = vadd.xlane.f32.xlu0 %v128
    %v130 = vpop.xlane.xlu0 %129
    %v131 = vmul.f32 %v130, 0.03125
    %vm132 = vcmask 7168
    %133 = vst.msk [vmem:[%s10] sm:$0xff] %vm132, %v131
    %134 = vst.msk [vmem:[#allocation3] sm:$0xff] %vm132, -inf
    %135 = vst.msk [vmem:[#allocation4] sm:$0xff] %vm132, 0.0
  $region37: #{pairwise_rec_forward.1} parent=0 // pred_fallthru
    _
  %v136 = vld [vmem:[#allocation2] sm:$0xf]
  %v137 = vld [vmem:[%s3] sm:$0xf]
  %v138 = vld [vmem:[%s3 + $0x4] sm:$0xf]
  %v139 = vld [vmem:[%s3 + $0x8] sm:$0xf]
  %v140 = vld [vmem:[%s3 + $0xc] sm:$0xf]
  %v145 = vunpack.c.l.b16 %v137
  %v146 = vunpack.c.l.b16 %v138
  %v147 = vunpack.c.l.b16 %v139
  %v148 = vunpack.c.l.b16 %v140
  %v149 = vpack.c.b16 %v146, %v145
  %v150 = vpack.c.b16 %v148, %v147
  %vm153 = vcmask 261120
  %v155 = vsel %vm153, %v136, 0
  %157 = vmatprep.subr.bf16.mxu0 0
  %158 = vmatpush1.bf16.msra.mxu0 %v149
  %159 = vmatprep.subr.bf16.mxu0 0
  %160 = vmatpush1.bf16.msra.mxu0 %v150
  %161 = vmatprep.subr.bf16.mxu0 0
  %162 = vmatpush1.bf16.msra.mxu0 0
  %163 = vmatprep.subr.bf16.mxu0 0
  %164 = vmatpush1.bf16.msra.mxu0 0
  %165 = vmatprep.subr.bf16.mxu0 0
  %166 = vmatpush1.bf16.msra.mxu0 0
  %167 = vmatprep.subr.bf16.mxu0 0
  %168 = vmatpush1.bf16.msra.mxu0 0
  %169 = vmatprep.subr.bf16.mxu0 0
  %170 = vmatpush1.bf16.msra.mxu0 0
  %171 = vmatprep.subr.bf16.mxu0 0
  %172 = vmatpush1.bf16.msra.mxu0 0
  %173 = vmatprep.subr.bf16.mxu0 0
  %174 = vmatpush1.bf16.msra.mxu0 0
  %175 = vmatprep.subr.bf16.mxu0 0
  %176 = vmatpush1.bf16.msra.mxu0 0
  %177 = vmatprep.subr.bf16.mxu0 0
  %178 = vmatpush1.bf16.msra.mxu0 0
  %179 = vmatprep.subr.bf16.mxu0 0
  %180 = vmatpush1.bf16.msra.mxu0 0
  %181 = vmatprep.subr.bf16.mxu0 0
  %182 = vmatpush1.bf16.msra.mxu0 0
  %183 = vmatprep.subr.bf16.mxu0 0
  %184 = vmatpush1.bf16.msra.mxu0 0
  %185 = vmatprep.subr.bf16.mxu0 0
  %186 = vmatpush1.bf16.msra.mxu0 0
  %187 = vmatprep.subr.bf16.mxu0 0
  %188 = vmatpush1.bf16.msra.mxu0 0
  %189 = vmatprep.mubr.bf16.mxu0 0
  %190 = vmatmul.mubr.bf16.gmra.mrb[0].mxu0 %v155
  %v191 = vpop.f32.mrb[0].mxu0
  %v192 = vadd.f32 0.0, %v191
  %v193 = vpop.f32.mrb[0].mxu0
  %v194 = vpop.f32.mrb[0].mxu0
  %v195 = vpop.f32.mrb[0].mxu0
  %196 = vdwg.mxu0
  %v197 = vpack.c.bf16 %v192, %v192
  %198 = vst [vmem:[%s8] sm:$0xf] %v197
  %v199 = vld [vmem:[#allocation3] sm:$0xff]
  %200 = vmax.xlane.f32.xlu0 %v192
  %v201 = vpop.xlane.xlu0 %200
  %v202 = vmax.f32 %v199, %v201
  %v203 = vld [vmem:[#allocation4] sm:$0xff]
  %v204 = vsub.f32 %v199, %v202
  %v205 = vmul.f32 %v204, 1.442695
  %v206 = vpow.pop %v205
  %v207 = vmul.f32 %v203, %v206
  %209 = vset.pattern.permute.xlu0 0
  %210 = vperm.xlu0 %209, %v202
  %v211 = vpop.permute.xlu0 %210
  %v213 = vsub.f32 %v192, %v211
  %v214 = vmul.f32 %v213, 1.442695
  %v215 = vpow.pop %v214
  %216 = vadd.xlane.f32.xlu0 %v215
  %v217 = vpop.xlane.xlu0 %216
  %v218 = vadd.f32 %v207, %v217
  %vm219 = vcmask 7168
  %220 = vst.msk [vmem:[#allocation4] sm:$0xff] %vm219, %v218
  %221 = vst.msk [vmem:[#allocation3] sm:$0xff] %vm219, %v202
  // Predicated region
  $region38: #{pairwise_rec_forward.1} parent=0 // pred_check
    %p222 = pneg %p33
  $region39: #{pairwise_rec_forward.1} parent=0 // pred_check_branch
    %224 = sbr.rel (%p222) target = $region41
  $region40: #{pairwise_rec_forward.1} parent=0 // pred_region
    %v225 = vld [vmem:[#allocation3] sm:$0xff]
    %v226 = vld [vmem:[#allocation4] sm:$0xff]
    %v227 = vlog2.pop %v226
    %v228 = vmul.f32 %v227, 0.6931472
    %v229 = vadd.f32 %v225, %v228
    %v230 = vld [vmem:[#allocation2] sm:$0xf]
    %v231 = vunpack.c.l.bf16 %v230
    %v232 = vld [vmem:[%s5] sm:$0xff]
    %v233 = vmul.f32 %v231, %v232
    %v234 = vsel %vm153, %v233, 0.0
    %235 = vadd.xlane.f32.xlu0 %v234
    %v236 = vpop.xlane.xlu0 %235
    %v237 = vsub.f32 0.0, %v236
    %v238 = vld [vmem:[%s6] sm:$0xff]
    %v239 = vmul.f32 %v229, %v238
    %v240 = vadd.f32 %v237, %v239
    %241 = vst.msk [vmem:[%s9] sm:$0xff] %vm219, %v240
  $region41: #{pairwise_rec_forward.1} parent=0 // pred_fallthru
    _
  // Predicated region
  $region42: #{pairwise_rec_forward.1} parent=0 // pred_check
    _
  $region43: #{pairwise_rec_forward.1} parent=0 // pred_check_branch
    %243 = sbr.rel (0) target = $region45
  $region44: #{pairwise_rec_forward.1} parent=0 // pred_region
    _
  $region45: #{pairwise_rec_forward.1} parent=0 // pred_fallthru
    _
  // Predicated region
  $region46: #{pairwise_rec_forward.1} parent=0 // pred_check
    _
  $region47: #{pairwise_rec_forward.1} parent=0 // pred_check_branch
    %245 = sbr.rel (0) target = $region49
  $region48: #{pairwise_rec_forward.1} parent=0 // pred_region
    _
  $region49: #{pairwise_rec_forward.1} parent=0 // pred_fallthru
    _
  // Predicated region
  $region50: #{pairwise_rec_forward.1} parent=0 // pred_check
    _
  $region51: #{pairwise_rec_forward.1} parent=0 // pred_check_branch
    %247 = sbr.rel (0) target = $region53
  $region52: #{pairwise_rec_forward.1} parent=0 // pred_region
    _
  $region53: #{pairwise_rec_forward.1} parent=0 // pred_fallthru
    _
  // Predicated region
  $region54: #{pairwise_rec_forward.1} parent=0 // pred_check
    _
  $region55: #{pairwise_rec_forward.1} parent=0 // pred_check_branch
    %249 = sbr.rel (0) target = $region57
  $region56: #{pairwise_rec_forward.1} parent=0 // pred_region
    _
  $region57: #{pairwise_rec_forward.1} parent=0 // pred_fallthru
    _
  // Predicated region
  $region58: #{pairwise_rec_forward.1} parent=0 // pred_check
    _
  $region59: #{pairwise_rec_forward.1} parent=0 // pred_check_branch
    %251 = sbr.rel (0) target = $region61
  $region60: #{pairwise_rec_forward.1} parent=0 // pred_region
    _
  $region61: #{pairwise_rec_forward.1} parent=0 // pred_fallthru
    _
  // Predicated region
  $region62: #{pairwise_rec_forward.1} parent=0 // pred_check
    _
  $region63: #{pairwise_rec_forward.1} parent=0 // pred_check_branch
    %253 = sbr.rel (0) target = $region65
  $region64: #{pairwise_rec_forward.1} parent=0 // pred_region
    _
  $region65: #{pairwise_rec_forward.1} parent=0 // pred_fallthru
    _

</llo_original>
